<compile_context>
chip_gen: v7x
topology: tpu7x:2x2x1
jax: 0.10.0
libtpu: 0.0.40
codegen_flags: <defaults>
</compile_context>

<pallas_src>
import functools

import jax
import jax.numpy as jnp
from jax.experimental import pallas as pl
from jax.experimental.pallas import tpu as pltpu


def _round_up(x, m):
    return (x + m - 1) // m * m


def mlp_kernel(x_ref, w1_ref, b1_ref, w2_ref, b2_ref, o_ref):
    # fc1: (TB, K) @ (K, H) on the MXU, f32 accumulate; bias + ReLU in f32 (VPU).
    h = jnp.dot(x_ref[...], w1_ref[...], preferred_element_type=jnp.float32)
    h = jnp.maximum(h + b1_ref[...], 0.0)
    # fc2: (TB, H) @ (H, N) on the MXU, f32 accumulate; bias add in f32.
    # Cast h to the MXU operand dtype (no-op for f32) so bf16 MXU is used when
    # requested while all elementwise math stays f32 (v5e-friendly).
    y = jnp.dot(h.astype(w2_ref.dtype), w2_ref[...],
                preferred_element_type=jnp.float32)
    o_ref[...] = (y + b2_ref[...]).astype(o_ref.dtype)


def simple_model_forward(x, w1, b1, w2, b2, *, block_batch=1024,
                         mxu_dtype=None):
    """Fused fc1 -> relu -> fc2.

    x:  (B, input_size) f32
    w1: (input_size, hidden_size), b1: (1, hidden_size)
    w2: (hidden_size, output_size), b2: (1, output_size)
    Weights stored (in, out) so the kernel computes x @ W directly, matching
    PyTorch nn.Linear's x @ W.T + b.

    mxu_dtype: optional narrower dtype (e.g. jnp.bfloat16) for the MXU
    operands x/W1/W2 only (v6e/v7x traffic win); biases and all elementwise
    math stay float32, accumulation is float32.
    """
    B, K = x.shape
    Kw, H = w1.shape
    Hw, N = w2.shape
    assert K == Kw and H == Hw and b1.shape == (1, H) and b2.shape == (1, N)

    out_dtype = jnp.float32

    # Optional narrow MXU operands; biases / elementwise stay f32.
    if mxu_dtype is not None:
        x = x.astype(mxu_dtype)
        w1 = w1.astype(mxu_dtype)
        w2 = w2.astype(mxu_dtype)
    b1 = b1.astype(jnp.float32)
    b2 = b2.astype(jnp.float32)

    # Sublane granularity for the batch tile (8 for f32, 16 for 2-byte dtypes).
    SUB = 16 if (mxu_dtype is not None
                 and jnp.dtype(mxu_dtype).itemsize == 2) else 8

    # Batch tile: multiple of SUB; aim for >=2 tiles whenever the batch needs
    # more than one so the "parallel" axis can shard across v7x's two
    # TensorCores; cap at block_batch so large batches pipeline with big,
    # overhead-amortising steps while the weights stay VMEM-resident.
    TB = min(block_batch, max(SUB, _round_up(-(-B // 2), SUB)))
    B_pad = _round_up(B, TB)

    # Only the batch dim of x is ever padded (cheap: K stays 10).  Feature /
    # hidden / output dims are left unpadded in HBM; Mosaic pads the VMEM
    # tiles to the (8, 128) layout internally, which is numerically exact.
    if B_pad != B:
        x = jnp.zeros((B_pad, K), x.dtype).at[:B].set(x)

    out = pl.pallas_call(
        mlp_kernel,
        out_shape=jax.ShapeDtypeStruct((B_pad, N), out_dtype),
        grid=(B_pad // TB,),
        in_specs=[
            pl.BlockSpec((TB, K), lambda i: (i, 0)),   # x: tiled on batch
            pl.BlockSpec((K, H), lambda i: (0, 0)),    # W1: resident, full dims
            pl.BlockSpec((1, H), lambda i: (0, 0)),    # b1: resident
            pl.BlockSpec((H, N), lambda i: (0, 0)),    # W2: resident
            pl.BlockSpec((1, N), lambda i: (0, 0)),    # b2: resident
        ],
        out_specs=pl.BlockSpec((TB, N), lambda i: (i, 0)),
        compiler_params=pltpu.CompilerParams(
            dimension_semantics=("parallel",)),        # shard batch tiles (v7x)
    )(x, w1, b1, w2, b2)

    # Strip batch padding (no-op for evenly tiled batches).
    return out[:B] if B_pad != B else out


def init_params(key, input_size=10, hidden_size=64, output_size=2):
    """Deterministic parameter init (PyTorch-like uniform fan-in scaling)."""
    k1, k2, k3, k4 = jax.random.split(key, 4)
    bound1 = 1.0 / (input_size ** 0.5)
    bound2 = 1.0 / (hidden_size ** 0.5)
    # Stored as (in, out) so the kernel does x @ W directly.
    w1 = jax.random.uniform(k1, (input_size, hidden_size), jnp.float32,
                            -bound1, bound1)
    b1 = jax.random.uniform(k2, (1, hidden_size), jnp.float32, -bound1, bound1)
    w2 = jax.random.uniform(k3, (hidden_size, output_size), jnp.float32,
                            -bound2, bound2)
    b2 = jax.random.uniform(k4, (1, output_size), jnp.float32, -bound2, bound2)
    return w1, b1, w2, b2


if __name__ == "__main__":
    key = jax.random.PRNGKey(0)
    kx, kp = jax.random.split(key)

    input_size, hidden_size, output_size = 10, 64, 2
    w1, b1, w2, b2 = init_params(kp, input_size, hidden_size, output_size)

    def ref_fwd(x):
        return jnp.maximum(x @ w1 + b1, 0.0) @ w2 + b2

    fwd_f32 = jax.jit(simple_model_forward)

    # Small batch: single tile, grid=(1,). Strict f32 tolerance.
    x_small = jax.random.normal(kx, (8, input_size), jnp.float32)
    out_small = jax.block_until_ready(fwd_f32(x_small, w1, b1, w2, b2))
    assert out_small.shape == (8, output_size)
    assert jnp.allclose(out_small, ref_fwd(x_small), atol=1e-5, rtol=1e-5)

    # Medium batch: exercises batch-only padding and a 2-tile parallel grid.
    x_med = jax.random.normal(kx, (100, input_size), jnp.float32)
    out_med = jax.block_until_ready(fwd_f32(x_med, w1, b1, w2, b2))
    assert out_med.shape == (100, output_size)
    assert jnp.allclose(out_med, ref_fwd(x_med), atol=1e-5, rtol=1e-5)

    # bf16 MXU-operand path (v6e/v7x HBM-traffic win); looser tolerance.
    fwd_bf16 = jax.jit(functools.partial(simple_model_forward,
                                         mxu_dtype=jnp.bfloat16))
    out_bf16 = jax.block_until_ready(fwd_bf16(x_med, w1, b1, w2, b2))
    assert out_bf16.shape == (100, output_size)
    assert jnp.allclose(out_bf16, ref_fwd(x_med), atol=5e-2, rtol=5e-2)

    print("KERNEL_OK")
</pallas_src>

<mosaic_0001>
module attributes {stable_mosaic.version = 11 : i64} {
  func.func @mlp_kernel(%arg0: i32, %arg1: memref<8x10xf32, #tpu.memory_space<vmem>>, %arg2: memref<10x64xf32, #tpu.memory_space<vmem>>, %arg3: memref<1x64xf32, #tpu.memory_space<vmem>>, %arg4: memref<64x2xf32, #tpu.memory_space<vmem>>, %arg5: memref<1x2xf32, #tpu.memory_space<vmem>>, %arg6: memref<8x2xf32, #tpu.memory_space<vmem>>) attributes {dimension_semantics = [#tpu.dimension_semantics<parallel>], iteration_bounds = array<i64: 1>, scalar_prefetch = 0 : i64, scratch_operands = 0 : i64, tpu.core_type = #tpu.core_type<tc>, window_params = [{transform_indices = @transform_0, window_bounds = array<i64: 8, 10>}, {pipeline_mode = #tpu.pipeline_mode<synchronous>, transform_indices = @transform_1, window_bounds = array<i64: 10, 64>}, {pipeline_mode = #tpu.pipeline_mode<synchronous>, transform_indices = @transform_2, window_bounds = array<i64: 1, 64>}, {pipeline_mode = #tpu.pipeline_mode<synchronous>, transform_indices = @transform_3, window_bounds = array<i64: 64, 2>}, {pipeline_mode = #tpu.pipeline_mode<synchronous>, transform_indices = @transform_4, window_bounds = array<i64: 1, 2>}, {transform_indices = @transform_5, window_bounds = array<i64: 8, 2>}]} {
    %c0 = arith.constant 0 : index
    %c0_0 = arith.constant 0 : index
    %0 = vector.load %arg1[%c0, %c0_0] : memref<8x10xf32, #tpu.memory_space<vmem>>, vector<8x10xf32>
    %c0_1 = arith.constant 0 : index
    %c0_2 = arith.constant 0 : index
    %1 = vector.load %arg2[%c0_1, %c0_2] : memref<10x64xf32, #tpu.memory_space<vmem>>, vector<10x64xf32>
    %cst = arith.constant dense<0.000000e+00> : vector<8x64xf32>
    %2 = tpu.matmul %0, %1, %cst {dimension_numbers = #tpu.dot_dimension_numbers<[1], [0], [0], [1], [0, 0, 1, 1], [], []>} : vector<8x10xf32>, vector<10x64xf32>, vector<8x64xf32> -> vector<8x64xf32>
    %c0_3 = arith.constant 0 : index
    %c0_4 = arith.constant 0 : index
    %3 = vector.load %arg3[%c0_3, %c0_4] : memref<1x64xf32, #tpu.memory_space<vmem>>, vector<1x64xf32>
    %4 = vector.broadcast %3 : vector<1x64xf32> to vector<8x64xf32>
    %5 = arith.addf %2, %4 : vector<8x64xf32>
    %cst_5 = arith.constant 0.000000e+00 : f32
    %6 = vector.broadcast %cst_5 : f32 to vector<8x64xf32>
    %7 = arith.maximumf %5, %6 : vector<8x64xf32>
    %c0_6 = arith.constant 0 : index
    %c0_7 = arith.constant 0 : index
    %8 = vector.load %arg4[%c0_6, %c0_7] : memref<64x2xf32, #tpu.memory_space<vmem>>, vector<64x2xf32>
    %cst_8 = arith.constant dense<0.000000e+00> : vector<8x2xf32>
    %9 = tpu.matmul %7, %8, %cst_8 {dimension_numbers = #tpu.dot_dimension_numbers<[1], [0], [0], [1], [0, 0, 1, 1], [], []>} : vector<8x64xf32>, vector<64x2xf32>, vector<8x2xf32> -> vector<8x2xf32>
    %c0_9 = arith.constant 0 : index
    %c0_10 = arith.constant 0 : index
    %10 = vector.load %arg5[%c0_9, %c0_10] : memref<1x2xf32, #tpu.memory_space<vmem>>, vector<1x2xf32>
    %11 = vector.broadcast %10 : vector<1x2xf32> to vector<8x2xf32>
    %12 = arith.addf %9, %11 : vector<8x2xf32>
    %c0_11 = arith.constant 0 : index
    %c0_12 = arith.constant 0 : index
    %13 = vector.load %arg6[%c0_11, %c0_12] : memref<8x2xf32, #tpu.memory_space<vmem>>, vector<8x2xf32>
    tpu.vector_store %arg6[%c0_11, %c0_12], %12 {strides = array<i32>} : memref<8x2xf32, #tpu.memory_space<vmem>>, vector<8x2xf32>,
    return
  }
  func.func @transform_0(%arg0: i32) -> (i32, i32) {
    %c0_i32 = arith.constant 0 : i32
    %c0_i32_0 = arith.constant 0 : i32
    return %arg0, %c0_i32 : i32, i32
  }
  func.func @transform_1(%arg0: i32) -> (i32, i32) {
    %c0_i32 = arith.constant 0 : i32
    %c0_i32_0 = arith.constant 0 : i32
    %c0_i32_1 = arith.constant 0 : i32
    return %c0_i32, %c0_i32_0 : i32, i32
  }
  func.func @transform_2(%arg0: i32) -> (i32, i32) {
    %c0_i32 = arith.constant 0 : i32
    %c0_i32_0 = arith.constant 0 : i32
    %c0_i32_1 = arith.constant 0 : i32
    return %c0_i32, %c0_i32_0 : i32, i32
  }
  func.func @transform_3(%arg0: i32) -> (i32, i32) {
    %c0_i32 = arith.constant 0 : i32
    %c0_i32_0 = arith.constant 0 : i32
    %c0_i32_1 = arith.constant 0 : i32
    return %c0_i32, %c0_i32_0 : i32, i32
  }
  func.func @transform_4(%arg0: i32) -> (i32, i32) {
    %c0_i32 = arith.constant 0 : i32
    %c0_i32_0 = arith.constant 0 : i32
    %c0_i32_1 = arith.constant 0 : i32
    return %c0_i32, %c0_i32_0 : i32, i32
  }
  func.func @transform_5(%arg0: i32) -> (i32, i32) {
    %c0_i32 = arith.constant 0 : i32
    %c0_i32_0 = arith.constant 0 : i32
    return %arg0, %c0_i32 : i32, i32
  }
}

</mosaic_0001>

<llo_original>
// kernel: simple_model_forward.1
$region0: #{simple_model_forward.1}
  #allocation0 [shape = 'u32[]', space=smem, size = 0x4, offset = 0x4, fixed_abs, tag = 'smem constant byte address 0x4 - core index']
  #allocation1 [shape = 'u32[144,128]{1,0:T(1,128)}', space=vmem, size = 0x12000, scoped, tag = 'internal scratch']
  %s0 = inlined_call_operand.vmem [shape: f32[8,10], index: 0, kind: input, shape index: {}]
  %s1 = inlined_call_operand.vmem [shape: f32[10,64], index: 1, kind: input, shape index: {}]
  %s2 = inlined_call_operand.vmem [shape: f32[1,64], index: 2, kind: input, shape index: {}]
  %s3 = inlined_call_operand.vmem [shape: f32[64,2], index: 3, kind: input, shape index: {}]
  %s4 = inlined_call_operand.vmem [shape: f32[1,2], index: 4, kind: input, shape index: {}]
  %s5 = inlined_call_operand.vmem [shape: f32[8,2], index: 5, kind: output, shape index: {}]
  %s6 = sld [smem:[#allocation0]]
  $region30: #{simple_model_forward.1} parent=0
    _
  %s8 = ssub.s32 1, %s6
  %s9 = scalar_select 0, %s8, %s6
  // Predicated region
  $region2: #{simple_model_forward.1} parent=0 // pred_check
    _
  $region3: #{simple_model_forward.1} parent=0 // pred_check_branch
    %11 = sbr.rel (0) target = $region5
  $region4: #{simple_model_forward.1} parent=0 // pred_region
    _
  $region5: #{simple_model_forward.1} parent=0 // pred_fallthru
    _
  // Predicated region
  $region6: #{simple_model_forward.1} parent=0 // pred_check
    _
  $region7: #{simple_model_forward.1} parent=0 // pred_check_branch
    %13 = sbr.rel (0) target = $region9
  $region8: #{simple_model_forward.1} parent=0 // pred_region
    _
  $region9: #{simple_model_forward.1} parent=0 // pred_fallthru
    _
  // Predicated region
  $region10: #{simple_model_forward.1} parent=0 // pred_check
    _
  $region11: #{simple_model_forward.1} parent=0 // pred_check_branch
    %15 = sbr.rel (0) target = $region13
  $region12: #{simple_model_forward.1} parent=0 // pred_region
    _
  $region13: #{simple_model_forward.1} parent=0 // pred_fallthru
    _
  // Predicated region
  $region14: #{simple_model_forward.1} parent=0 // pred_check
    _
  $region15: #{simple_model_forward.1} parent=0 // pred_check_branch
    %17 = sbr.rel (0) target = $region17
  $region16: #{simple_model_forward.1} parent=0 // pred_region
    _
  $region17: #{simple_model_forward.1} parent=0 // pred_fallthru
    _
  // Predicated region
  $region18: #{simple_model_forward.1} parent=0 // pred_check
    _
  $region19: #{simple_model_forward.1} parent=0 // pred_check_branch
    %19 = sbr.rel (0) target = $region21
  $region20: #{simple_model_forward.1} parent=0 // pred_region
    _
  $region21: #{simple_model_forward.1} parent=0 // pred_fallthru
    _
  %v20 = vld [vmem:[%s0] sm:$0xff]
  %v21 = vld [vmem:[%s1] sm:$0xff]
  %v22 = vld [vmem:[%s1 + $0x8] sm:$0x3]
  %v23 = vld [vmem:[%s2] sm:$0x1]
  %v25 = vlaneseq
  %v26 = vshrl.u32 %v25, 7
  %v27 = vsub.s32 0, %v26
  %v28 = vrot.slane %v23, %v27
  %vm30 = vcmask 80896
  %v32 = vsel %vm30, %v20, 0
  %vm34 = vcmask 1041408
  %v36 = vsel %vm34, %v22, 0
  %38 = vmatprep.subr.mxu0 0.0
  %39 = vmatpush1.msra.mxu0 %v21
  %40 = vmatprep.subr.mxu0 0.0
  %41 = vmatpush1.msra.mxu0 %v36
  %42 = vmatprep.subr.mxu0 0.0
  %43 = vmatpush1.msra.mxu0 0.0
  %44 = vmatprep.subr.mxu0 0.0
  %45 = vmatpush1.msra.mxu0 0.0
  %46 = vmatprep.subr.mxu0 0.0
  %47 = vmatpush1.msra.mxu0 0.0
  %48 = vmatprep.subr.mxu0 0.0
  %49 = vmatpush1.msra.mxu0 0.0
  %50 = vmatprep.subr.mxu0 0.0
  %51 = vmatpush1.msra.mxu0 0.0
  %52 = vmatprep.subr.mxu0 0.0
  %53 = vmatpush1.msra.mxu0 0.0
  %54 = vmatprep.subr.mxu0 0.0
  %55 = vmatpush1.msra.mxu0 0.0
  %56 = vmatprep.subr.mxu0 0.0
  %57 = vmatpush1.msra.mxu0 0.0
  %58 = vmatprep.subr.mxu0 0.0
  %59 = vmatpush1.msra.mxu0 0.0
  %60 = vmatprep.subr.mxu0 0.0
  %61 = vmatpush1.msra.mxu0 0.0
  %62 = vmatprep.subr.mxu0 0.0
  %63 = vmatpush1.msra.mxu0 0.0
  %64 = vmatprep.subr.mxu0 0.0
  %65 = vmatpush1.msra.mxu0 0.0
  %66 = vmatprep.subr.mxu0 0.0
  %67 = vmatpush1.msra.mxu0 0.0
  %68 = vmatprep.subr.mxu0 0.0
  %69 = vmatpush1.msra.mxu0 0.0
  %70 = vmatprep.subr.mxu0 0.0
  %71 = vmatpush1.msra.mxu0 0.0
  %72 = vmatprep.subr.mxu0 0.0
  %73 = vmatpush1.msra.mxu0 0.0
  %74 = vmatprep.subr.mxu0 0.0
  %75 = vmatpush1.msra.mxu0 0.0
  %76 = vmatprep.subr.mxu0 0.0
  %77 = vmatpush1.msra.mxu0 0.0
  %78 = vmatprep.subr.mxu0 0.0
  %79 = vmatpush1.msra.mxu0 0.0
  %80 = vmatprep.subr.mxu0 0.0
  %81 = vmatpush1.msra.mxu0 0.0
  %82 = vmatprep.subr.mxu0 0.0
  %83 = vmatpush1.msra.mxu0 0.0
  %84 = vmatprep.subr.mxu0 0.0
  %85 = vmatpush1.msra.mxu0 0.0
  %86 = vmatprep.subr.mxu0 0.0
  %87 = vmatpush1.msra.mxu0 0.0
  %88 = vmatprep.subr.mxu0 0.0
  %89 = vmatpush1.msra.mxu0 0.0
  %90 = vmatprep.subr.mxu0 0.0
  %91 = vmatpush1.msra.mxu0 0.0
  %92 = vmatprep.subr.mxu0 0.0
  %93 = vmatpush1.msra.mxu0 0.0
  %94 = vmatprep.subr.mxu0 0.0
  %95 = vmatpush1.msra.mxu0 0.0
  %96 = vmatprep.subr.mxu0 0.0
  %97 = vmatpush1.msra.mxu0 0.0
  %98 = vmatprep.subr.mxu0 0.0
  %99 = vmatpush1.msra.mxu0 0.0
  %100 = vmatprep.subr.mxu0 0.0
  %101 = vmatpush1.msra.mxu0 0.0
  %102 = vmatprep.mubr.f32.mxu0 0.0
  %103 = vmatmul.mubr.f32.gmra.mrb[0].mxu0 %v32
  %v104 = vpop.f32.mrb[0].mxu0
  %v105 = vadd.f32 %v28, %v104
  %v106 = vpop.f32.mrb[0].mxu0
  %107 = vdwg.mxu0
  %v108 = vmax.f32 %v105, 0.0
  %v109 = vld [vmem:[%s3] sm:$0xff]
  %v110 = vld [vmem:[%s3 + $0x8] sm:$0xff]
  %v111 = vld [vmem:[%s3 + $0x10] sm:$0xff]
  %v112 = vld [vmem:[%s3 + $0x18] sm:$0xff]
  %v113 = vld [vmem:[%s3 + $0x20] sm:$0xff]
  %v114 = vld [vmem:[%s3 + $0x28] sm:$0xff]
  %v115 = vld [vmem:[%s3 + $0x30] sm:$0xff]
  %v116 = vld [vmem:[%s3 + $0x38] sm:$0xff]
  %v117 = vld [vmem:[%s4] sm:$0x1]
  %v119 = vlaneseq
  %v120 = vshrl.u32 %v119, 7
  %v121 = vsub.s32 0, %v120
  %v122 = vrot.slane %v117, %v121
  %vm124 = vcmask 523264
  %v126 = vsel %vm124, %v108, 0
  %128 = vmatprep.subr.mxu0 0.0
  %129 = vmatpush1.msra.mxu0 %v109
  %130 = vmatprep.subr.mxu0 0.0
  %131 = vmatpush1.msra.mxu0 %v110
  %132 = vmatprep.subr.mxu0 0.0
  %133 = vmatpush1.msra.mxu0 %v111
  %134 = vmatprep.subr.mxu0 0.0
  %135 = vmatpush1.msra.mxu0 %v112
  %136 = vmatprep.subr.mxu0 0.0
  %137 = vmatpush1.msra.mxu0 %v113
  %138 = vmatprep.subr.mxu0 0.0
  %139 = vmatpush1.msra.mxu0 %v114
  %140 = vmatprep.subr.mxu0 0.0
  %141 = vmatpush1.msra.mxu0 %v115
  %142 = vmatprep.subr.mxu0 0.0
  %143 = vmatpush1.msra.mxu0 %v116
  %144 = vmatprep.subr.mxu0 0.0
  %145 = vmatpush1.msra.mxu0 0.0
  %146 = vmatprep.subr.mxu0 0.0
  %147 = vmatpush1.msra.mxu0 0.0
  %148 = vmatprep.subr.mxu0 0.0
  %149 = vmatpush1.msra.mxu0 0.0
  %150 = vmatprep.subr.mxu0 0.0
  %151 = vmatpush1.msra.mxu0 0.0
  %152 = vmatprep.subr.mxu0 0.0
  %153 = vmatpush1.msra.mxu0 0.0
  %154 = vmatprep.subr.mxu0 0.0
  %155 = vmatpush1.msra.mxu0 0.0
  %156 = vmatprep.subr.mxu0 0.0
  %157 = vmatpush1.msra.mxu0 0.0
  %158 = vmatprep.subr.mxu0 0.0
  %159 = vmatpush1.msra.mxu0 0.0
  %160 = vmatprep.subr.mxu0 0.0
  %161 = vmatpush1.msra.mxu0 0.0
  %162 = vmatprep.subr.mxu0 0.0
  %163 = vmatpush1.msra.mxu0 0.0
  %164 = vmatprep.subr.mxu0 0.0
  %165 = vmatpush1.msra.mxu0 0.0
  %166 = vmatprep.subr.mxu0 0.0
  %167 = vmatpush1.msra.mxu0 0.0
  %168 = vmatprep.subr.mxu0 0.0
  %169 = vmatpush1.msra.mxu0 0.0
  %170 = vmatprep.subr.mxu0 0.0
  %171 = vmatpush1.msra.mxu0 0.0
  %172 = vmatprep.subr.mxu0 0.0
  %173 = vmatpush1.msra.mxu0 0.0
  %174 = vmatprep.subr.mxu0 0.0
  %175 = vmatpush1.msra.mxu0 0.0
  %176 = vmatprep.subr.mxu0 0.0
  %177 = vmatpush1.msra.mxu0 0.0
  %178 = vmatprep.subr.mxu0 0.0
  %179 = vmatpush1.msra.mxu0 0.0
  %180 = vmatprep.subr.mxu0 0.0
  %181 = vmatpush1.msra.mxu0 0.0
  %182 = vmatprep.subr.mxu0 0.0
  %183 = vmatpush1.msra.mxu0 0.0
  %184 = vmatprep.subr.mxu0 0.0
  %185 = vmatpush1.msra.mxu0 0.0
  %186 = vmatprep.subr.mxu0 0.0
  %187 = vmatpush1.msra.mxu0 0.0
  %188 = vmatprep.subr.mxu0 0.0
  %189 = vmatpush1.msra.mxu0 0.0
  %190 = vmatprep.subr.mxu0 0.0
  %191 = vmatpush1.msra.mxu0 0.0
  %192 = vmatprep.mubr.f32.mxu0 0.0
  %193 = vmatmul.mubr.f32.gmra.mrb[0].mxu0 %v126
  %v194 = vpop.f32.mrb[0].mxu0
  %v195 = vadd.f32 %v122, %v194
  %v196 = vpop.f32.mrb[0].mxu0
  %197 = vdwg.mxu0
  %vm198 = vcmask 15360
  %199 = vst.msk [vmem:[%s5] sm:$0xff] %vm198, %v195
  // Predicated region
  $region22: #{simple_model_forward.1} parent=0 // pred_check
    _
  $region23: #{simple_model_forward.1} parent=0 // pred_check_branch
    %201 = sbr.rel (0) target = $region25
  $region24: #{simple_model_forward.1} parent=0 // pred_region
    _
  $region25: #{simple_model_forward.1} parent=0 // pred_fallthru
    _
  // Predicated region
  $region26: #{simple_model_forward.1} parent=0 // pred_check
    _
  $region27: #{simple_model_forward.1} parent=0 // pred_check_branch
    %203 = sbr.rel (0) target = $region29
  $region28: #{simple_model_forward.1} parent=0 // pred_region
    _
  $region29: #{simple_model_forward.1} parent=0 // pred_fallthru
    _

</llo_original>
